<compile_context>
chip_gen: v7x
topology: tpu7x:2x2x1
jax: 0.10.0
libtpu: 0.0.40
codegen_flags: <defaults>
</compile_context>

<pallas_src>
import functools

import jax
import jax.numpy as jnp
from jax.experimental import pallas as pl
from jax.experimental.pallas import tpu as pltpu

_LANE = 128      # lane width  (last dim granularity)
_SUBLANE = 8     # sublane width (second-to-last dim granularity)


def _round_up(n, m):
    return ((n + m - 1) // m) * m


# --------------------------------------------------------------------------
# One-time parameter preparation (padding hoisted out of the forward path).
# --------------------------------------------------------------------------
def prepare_classifier_params(params):
    """Pad weights/biases to lane-dense shapes ONCE.

    params: list of (w, b) with w of shape (n_in, n_out) and b of shape (n_out,)
    Returns (w_ps, b_all):
      w_ps:  tuple of padded weights.  Layer 0 keeps K = n_in unpadded (the
             block equals the full array, MXU pads K internally); layers i>0
             use K = padded output width of layer i-1.  Output dims are padded
             to multiples of 128 with zeros (numerically exact).
      b_all: (n_layers, max_out_pad) f32 buffer, one row per layer -> one DMA.
    """
    n_layers = len(params)
    n_in = params[0][0].shape[0]
    out_dims = [w.shape[1] for w, _ in params]
    out_pads = [_round_up(d, _LANE) for d in out_dims]
    in_dims = [n_in] + out_pads[:-1]
    max_out = max(out_pads)

    w_ps = []
    for i, (w, _) in enumerate(params):
        wp = jnp.zeros((in_dims[i], out_pads[i]), w.dtype)
        wp = wp.at[: w.shape[0], : w.shape[1]].set(w)
        w_ps.append(wp)

    b_all = jnp.zeros((n_layers, max_out), jnp.float32)
    for i, (_, b) in enumerate(params):
        b_all = b_all.at[i, : b.shape[-1]].set(
            b.astype(jnp.float32).reshape(-1))

    return tuple(w_ps), b_all


# --------------------------------------------------------------------------
# Fused MLP kernel.
# --------------------------------------------------------------------------
def _mlp_kernel(*refs, n_layers, out_pads, relu_flags):
    """refs = (x, w0..w_{L-1}, bias_all, out)

    x:        (tb, n_in)                  unpadded feature dim
    w_i:      (K_i, out_pads[i])          zero-padded, fully resident
    bias_all: (n_layers, max_out_pad)     f32, zero-padded
    out:      (tb, out_pads[-1])
    """
    x_ref = refs[0]
    w_refs = refs[1:1 + n_layers]
    b_ref = refs[1 + n_layers]
    o_ref = refs[2 + n_layers]

    h = x_ref[...]
    for i in range(n_layers):
        w = w_refs[i][...]
        # Dot in the weights' storage dtype (bf16 on v6e/v7x for MXU speed);
        # accumulate in f32.  Epilogue (bias + ReLU) stays f32.
        y = jnp.dot(h.astype(w.dtype), w, preferred_element_type=jnp.float32)
        y = y + b_ref[i:i + 1, :out_pads[i]]          # lane-dense static slice
        if relu_flags[i]:
            y = jnp.maximum(y, 0.0)
        h = y                                         # f32 running activation
    o_ref[...] = h.astype(o_ref.dtype)


# --------------------------------------------------------------------------
# Forward pass (jit-friendly: out_features / flags / batch_tile are static).
# --------------------------------------------------------------------------
def classifier_forward(x, w_ps, b_all, *, out_features,
                       activation_on_final_layer=False, batch_tile=512):
    """Matches Classifier.forward: Linear -> ReLU for every layer except the
    last (unless activation_on_final_layer).  One fused Pallas kernel."""
    batch, n_in = x.shape
    n_layers = len(w_ps)
    out_pads = tuple(int(w.shape[1]) for w in w_ps)
    max_out = int(b_all.shape[1])
    x_itemsize = jnp.dtype(x.dtype).itemsize

    # ---- batch tiling -----------------------------------------------------
    batch8 = _round_up(batch, _SUBLANE)
    tb_cap = max(_SUBLANE, (int(batch_tile) // _SUBLANE) * _SUBLANE)
    tb = min(tb_cap, batch8)
    if batch8 >= 2 * _SUBLANE:
        # Prefer >=2 grid steps so the "parallel" axis can use both
        # TensorCores on v7x (also keeps padding waste <= one tile).
        tb = min(tb, _round_up(pl.cdiv(batch8, 2), _SUBLANE))
    n_tiles = pl.cdiv(batch8, tb)
    batch_pad = n_tiles * tb

    if batch_pad != batch:
        x_in = jnp.pad(x, ((0, batch_pad - batch), (0, 0)))
    else:
        x_in = x

    relu_flags = tuple(
        (i != n_layers - 1) or activation_on_final_layer
        for i in range(n_layers))

    kernel = functools.partial(
        _mlp_kernel, n_layers=n_layers, out_pads=out_pads,
        relu_flags=relu_flags)

    # ---- BlockSpecs ---------------------------------------------------------
    # Activations: batch-tiled (double-buffered pipeline).
    in_specs = [pl.BlockSpec((tb, n_in), lambda i: (i, 0))]
    # Weights & bias: whole-block, grid-invariant -> single-buffered.
    for li in range(n_layers):
        in_specs.append(
            pl.BlockSpec(tuple(int(d) for d in w_ps[li].shape),
                         lambda i: (0, 0),
                         pipeline_mode=pl.Buffered(1)))
    in_specs.append(
        pl.BlockSpec((n_layers, max_out), lambda i: (0, 0),
                     pipeline_mode=pl.Buffered(1)))
    out_spec = pl.BlockSpec((tb, out_pads[-1]), lambda i: (i, 0))

    # ---- cost estimate ------------------------------------------------------
    weight_bytes = sum(int(w.size) * jnp.dtype(w.dtype).itemsize for w in w_ps)
    bias_bytes = int(b_all.size) * 4
    flops = sum(2 * batch_pad * int(w.shape[0]) * int(w.shape[1])
                for w in w_ps)
    bytes_accessed = (x_in.size * x_itemsize + weight_bytes + bias_bytes
                      + batch_pad * out_pads[-1] * x_itemsize)
    cost = pl.CostEstimate(flops=flops, transcendentals=0,
                           bytes_accessed=bytes_accessed)

    # ---- VMEM budget (generation-aware) -------------------------------------
    act_bytes = 2 * tb * (n_in + out_pads[-1]) * x_itemsize      # dbl-buffered
    inter_bytes = 2 * tb * max(max_out, n_in) * 4                # f32 scratch
    need = weight_bytes + bias_bytes + act_bytes + inter_bytes
    try:
        vmem_cap = int(pltpu.get_tpu_info().vmem_capacity_bytes)
    except Exception:
        vmem_cap = 64 << 20                                      # v7x floor
    vmem_limit = int(min(max(2 * need, 32 << 20), int(0.85 * vmem_cap)))

    out_p = pl.pallas_call(
        kernel,
        out_shape=jax.ShapeDtypeStruct((batch_pad, out_pads[-1]), x.dtype),
        grid=(n_tiles,),
        in_specs=in_specs,
        out_specs=out_spec,
        compiler_params=pltpu.CompilerParams(
            dimension_semantics=("parallel",),
            vmem_limit_bytes=vmem_limit,
        ),
        cost_estimate=cost,
    )(x_in, *w_ps, b_all)

    if batch_pad != batch or out_pads[-1] != out_features:
        out_p = out_p[:batch, :out_features]
    return out_p


# --------------------------------------------------------------------------
# Init + pure-JAX reference.
# --------------------------------------------------------------------------
def init_classifier_params(key, sizes, dtype=jnp.float32):
    """Mimics torch.nn.Linear default init U[-1/sqrt(n_in), 1/sqrt(n_in)].
    Weights stored (n_in, n_out).  Use dtype=jnp.bfloat16 on v6e/v7x for
    ~2-3x MXU throughput (accumulation stays f32)."""
    params = []
    for n_in, n_out in zip(sizes[:-1], sizes[1:]):
        key, kw, kb = jax.random.split(key, 3)
        bound = 1.0 / (n_in ** 0.5)
        w = jax.random.uniform(kw, (n_in, n_out), dtype,
                               minval=-bound, maxval=bound)
        b = jax.random.uniform(kb, (n_out,), dtype,
                               minval=-bound, maxval=bound)
        params.append((w, b))
    return params


def classifier_ref(x, params, activation_on_final_layer=False):
    n_layers = len(params)
    for i, (w, b) in enumerate(params):
        x = x @ w + b
        if i != n_layers - 1 or activation_on_final_layer:
            x = jnp.maximum(x, 0.0)
    return x


if __name__ == "__main__":
    # sizes[0] is the input feature size; the rest are layer output sizes.
    sizes = [32, 64, 48, 10]
    batch = 8

    key = jax.random.PRNGKey(0)
    key, kx = jax.random.split(key)
    x = jax.random.normal(kx, (batch, sizes[0]), jnp.float32)
    params = init_classifier_params(key, sizes)

    # One-time padding of parameters (hoisted out of the per-call path).
    w_ps, b_all = prepare_classifier_params(params)

    fwd = jax.jit(
        classifier_forward,
        static_argnames=("out_features", "activation_on_final_layer",
                         "batch_tile"))

    out = fwd(x, w_ps, b_all, out_features=sizes[-1],
              activation_on_final_layer=False)
    out = jax.block_until_ready(out)

    ref = classifier_ref(x, params, activation_on_final_layer=False)
    assert out.shape == (batch, sizes[-1]), out.shape
    assert jnp.allclose(out, ref, atol=1e-5, rtol=1e-5), "mismatch vs reference"

    print("KERNEL_OK")
</pallas_src>

<mosaic_0001>
module attributes {stable_mosaic.version = 11 : i64} {
  func.func @_mlp_kernel(%arg0: i32, %arg1: memref<8x32xf32, #tpu.memory_space<vmem>>, %arg2: memref<32x128xf32, #tpu.memory_space<vmem>>, %arg3: memref<128x128xf32, #tpu.memory_space<vmem>>, %arg4: memref<128x128xf32, #tpu.memory_space<vmem>>, %arg5: memref<3x128xf32, #tpu.memory_space<vmem>>, %arg6: memref<8x128xf32, #tpu.memory_space<vmem>>) attributes {dimension_semantics = [#tpu.dimension_semantics<parallel>], iteration_bounds = array<i64: 1>, scalar_prefetch = 0 : i64, scratch_operands = 0 : i64, tpu.core_type = #tpu.core_type<tc>, window_params = [{transform_indices = @transform_0, window_bounds = array<i64: 8, 32>}, {pipeline_mode = #tpu.pipeline_mode<synchronous>, transform_indices = @transform_1, window_bounds = array<i64: 32, 128>}, {pipeline_mode = #tpu.pipeline_mode<synchronous>, transform_indices = @transform_2, window_bounds = array<i64: 128, 128>}, {pipeline_mode = #tpu.pipeline_mode<synchronous>, transform_indices = @transform_3, window_bounds = array<i64: 128, 128>}, {pipeline_mode = #tpu.pipeline_mode<synchronous>, transform_indices = @transform_4, window_bounds = array<i64: 3, 128>}, {transform_indices = @transform_5, window_bounds = array<i64: 8, 128>}]} {
    %c0 = arith.constant 0 : index
    %c0_0 = arith.constant 0 : index
    %0 = vector.load %arg1[%c0, %c0_0] : memref<8x32xf32, #tpu.memory_space<vmem>>, vector<8x32xf32>
    %c0_1 = arith.constant 0 : index
    %c0_2 = arith.constant 0 : index
    %1 = vector.load %arg2[%c0_1, %c0_2] : memref<32x128xf32, #tpu.memory_space<vmem>>, vector<32x128xf32>
    %cst = arith.constant dense<0.000000e+00> : vector<8x128xf32>
    %2 = tpu.matmul %0, %1, %cst {dimension_numbers = #tpu.dot_dimension_numbers<[1], [0], [0], [1], [0, 0, 1, 1], [], []>} : vector<8x32xf32>, vector<32x128xf32>, vector<8x128xf32> -> vector<8x128xf32>
    %c0_3 = arith.constant 0 : index
    %c0_4 = arith.constant 0 : index
    %3 = vector.load %arg5[%c0_3, %c0_4] : memref<3x128xf32, #tpu.memory_space<vmem>>, vector<1x128xf32>
    %4 = vector.broadcast %3 : vector<1x128xf32> to vector<8x128xf32>
    %5 = arith.addf %2, %4 : vector<8x128xf32>
    %cst_5 = arith.constant 0.000000e+00 : f32
    %6 = vector.broadcast %cst_5 : f32 to vector<8x128xf32>
    %7 = arith.maximumf %5, %6 : vector<8x128xf32>
    %c0_6 = arith.constant 0 : index
    %c0_7 = arith.constant 0 : index
    %8 = vector.load %arg3[%c0_6, %c0_7] : memref<128x128xf32, #tpu.memory_space<vmem>>, vector<128x128xf32>
    %cst_8 = arith.constant dense<0.000000e+00> : vector<8x128xf32>
    %9 = tpu.matmul %7, %8, %cst_8 {dimension_numbers = #tpu.dot_dimension_numbers<[1], [0], [0], [1], [0, 0, 1, 1], [], []>} : vector<8x128xf32>, vector<128x128xf32>, vector<8x128xf32> -> vector<8x128xf32>
    %c1 = arith.constant 1 : index
    %c0_9 = arith.constant 0 : index
    %10 = vector.load %arg5[%c1, %c0_9] : memref<3x128xf32, #tpu.memory_space<vmem>>, vector<1x128xf32>
    %11 = vector.broadcast %10 : vector<1x128xf32> to vector<8x128xf32>
    %12 = arith.addf %9, %11 : vector<8x128xf32>
    %cst_10 = arith.constant 0.000000e+00 : f32
    %13 = vector.broadcast %cst_10 : f32 to vector<8x128xf32>
    %14 = arith.maximumf %12, %13 : vector<8x128xf32>
    %c0_11 = arith.constant 0 : index
    %c0_12 = arith.constant 0 : index
    %15 = vector.load %arg4[%c0_11, %c0_12] : memref<128x128xf32, #tpu.memory_space<vmem>>, vector<128x128xf32>
    %cst_13 = arith.constant dense<0.000000e+00> : vector<8x128xf32>
    %16 = tpu.matmul %14, %15, %cst_13 {dimension_numbers = #tpu.dot_dimension_numbers<[1], [0], [0], [1], [0, 0, 1, 1], [], []>} : vector<8x128xf32>, vector<128x128xf32>, vector<8x128xf32> -> vector<8x128xf32>
    %c2 = arith.constant 2 : index
    %c0_14 = arith.constant 0 : index
    %17 = vector.load %arg5[%c2, %c0_14] : memref<3x128xf32, #tpu.memory_space<vmem>>, vector<1x128xf32>
    %18 = vector.broadcast %17 : vector<1x128xf32> to vector<8x128xf32>
    %19 = arith.addf %16, %18 : vector<8x128xf32>
    %c0_15 = arith.constant 0 : index
    %c0_16 = arith.constant 0 : index
    %20 = vector.load %arg6[%c0_15, %c0_16] : memref<8x128xf32, #tpu.memory_space<vmem>>, vector<8x128xf32>
    tpu.vector_store %arg6[%c0_15, %c0_16], %19 {strides = array<i32>} : memref<8x128xf32, #tpu.memory_space<vmem>>, vector<8x128xf32>,
    return
  }
  func.func @transform_0(%arg0: i32) -> (i32, i32) {
    %c0_i32 = arith.constant 0 : i32
    %c0_i32_0 = arith.constant 0 : i32
    return %arg0, %c0_i32 : i32, i32
  }
  func.func @transform_1(%arg0: i32) -> (i32, i32) {
    %c0_i32 = arith.constant 0 : i32
    %c0_i32_0 = arith.constant 0 : i32
    %c0_i32_1 = arith.constant 0 : i32
    return %c0_i32, %c0_i32_0 : i32, i32
  }
  func.func @transform_2(%arg0: i32) -> (i32, i32) {
    %c0_i32 = arith.constant 0 : i32
    %c0_i32_0 = arith.constant 0 : i32
    %c0_i32_1 = arith.constant 0 : i32
    return %c0_i32, %c0_i32_0 : i32, i32
  }
  func.func @transform_3(%arg0: i32) -> (i32, i32) {
    %c0_i32 = arith.constant 0 : i32
    %c0_i32_0 = arith.constant 0 : i32
    %c0_i32_1 = arith.constant 0 : i32
    return %c0_i32, %c0_i32_0 : i32, i32
  }
  func.func @transform_4(%arg0: i32) -> (i32, i32) {
    %c0_i32 = arith.constant 0 : i32
    %c0_i32_0 = arith.constant 0 : i32
    %c0_i32_1 = arith.constant 0 : i32
    return %c0_i32, %c0_i32_0 : i32, i32
  }
  func.func @transform_5(%arg0: i32) -> (i32, i32) {
    %c0_i32 = arith.constant 0 : i32
    %c0_i32_0 = arith.constant 0 : i32
    return %arg0, %c0_i32 : i32, i32
  }
}

</mosaic_0001>

<llo_original>
// kernel: classifier_forward.1
$region0: #{classifier_forward.1}
  #allocation0 [shape = 'u32[]', space=smem, size = 0x4, offset = 0x4, fixed_abs, tag = 'smem constant byte address 0x4 - core index']
  #allocation1 [shape = 'u32[144,128]{1,0:T(1,128)}', space=vmem, size = 0x12000, scoped, tag = 'internal scratch']
  %s0 = inlined_call_operand.hbm [shape: f32[8,32], index: 0, kind: input, shape index: {}]
  %s1 = inlined_call_operand.hbm [shape: f32[32,128], index: 1, kind: input, shape index: {}]
  %s2 = inlined_call_operand.hbm [shape: f32[128,128], index: 2, kind: input, shape index: {}]
  %s3 = inlined_call_operand.hbm [shape: f32[128,128], index: 3, kind: input, shape index: {}]
  %s4 = inlined_call_operand.vmem [shape: f32[3,128], index: 4, kind: input, shape index: {}]
  %s5 = inlined_call_operand.hbm [shape: f32[8,128], index: 5, kind: output, shape index: {}]
  %s6 = sld [smem:[#allocation0]]
  $region46: #{classifier_forward.1} parent=0
    _
  %s8 = ssub.s32 1, %s6
  %s9 = scalar_select 0, %s8, %s6
  $region1: #{classifier_forward.1} parent=0
    #allocation2 [shape = 'u8[4096]{0}', space=vmem, size = 0x1000, scoped, tag = 'input window, operand 0, single buffered']
    #allocation3 [shape = 's32[1]{0}', space=sflag, size = 0x4, scoped, tag = 'scoped memory for classifier_forward.1']
    #allocation4 [shape = 's32[1]{0}', space=sflag, size = 0x4, scoped, tag = 'scoped memory for classifier_forward.1']
    #allocation5 [shape = 'u8[16384]{0}', space=vmem, size = 0x4000, scoped, tag = 'input window, operand 1, single buffered']
    #allocation6 [shape = 's32[1]{0}', space=sflag, size = 0x4, scoped, tag = 'scoped memory for classifier_forward.1']
    #allocation7 [shape = 'u8[65536]{0}', space=vmem, size = 0x10000, scoped, tag = 'input window, operand 2, single buffered']
    #allocation8 [shape = 'u8[65536]{0}', space=vmem, size = 0x10000, scoped, tag = 'input window, operand 3, single buffered']
    #allocation9 [shape = 's32[1]{0}', space=sflag, size = 0x4, scoped, tag = 'scoped memory for classifier_forward.1']
    #allocation10 [shape = 'u8[4096]{0}', space=vmem, size = 0x1000, scoped, tag = 'output window, operand 0, single buffered']
    %10 = vsyncpa [#allocation3], 0
    %11 = vsyncpa [#allocation6], 0
    %12 = vsyncpa [#allocation9], 0
    %13 = vsyncpa [#allocation4], 0
    // Predicated region
    $region2: #{classifier_forward.1} parent=1 // pred_check
      _
    $region3: #{classifier_forward.1} parent=1 // pred_check_branch
      %15 = sbr.rel (0) target = $region5
    $region4: #{classifier_forward.1} parent=1 // pred_region
      %s17 = ssub.s32 128, 128
      %18 = vsyncadd [#allocation3], %s17
      %s20 = sshll.u32 [#allocation2], 4
      %s21 = int_to_ptr.vmem [resolvable:$true] %s20
      %23 = dma.hbm_to_vmem [thread:$0]  %s0, 128, %s21, [#allocation3]
    $region5: #{classifier_forward.1} parent=1 // pred_fallthru
      _
    // Predicated region
    $region6: #{classifier_forward.1} parent=1 // pred_check
      _
    $region7: #{classifier_forward.1} parent=1 // pred_check_branch
      %25 = sbr.rel (0) target = $region9
    $region8: #{classifier_forward.1} parent=1 // pred_region
      %s27 = ssub.s32 512, 512
      %28 = vsyncadd [#allocation6], %s27
      %s29 = sshll.u32 [#allocation5], 4
      %s30 = int_to_ptr.vmem [resolvable:$true] %s29
      %35 = dma.hbm_to_vmem [thread:$0]  %s1, 512, %s30, [#allocation6], 128, 128, 8
    $region9: #{classifier_forward.1} parent=1 // pred_fallthru
      _
    // Predicated region
    $region10: #{classifier_forward.1} parent=1 // pred_check
      _
    $region11: #{classifier_forward.1} parent=1 // pred_check_branch
      %37 = sbr.rel (0) target = $region13
    $region12: #{classifier_forward.1} parent=1 // pred_region
      %s39 = ssub.s32 2048, 2048
      %40 = vsyncadd [#allocation6], %s39
      %s41 = sshll.u32 [#allocation7], 4
      %s42 = int_to_ptr.vmem [resolvable:$true] %s41
      %47 = dma.hbm_to_vmem [thread:$0]  %s2, 2048, %s42, [#allocation6], 128, 128, 8
    $region13: #{classifier_forward.1} parent=1 // pred_fallthru
      _
    // Predicated region
    $region14: #{classifier_forward.1} parent=1 // pred_check
      _
    $region15: #{classifier_forward.1} parent=1 // pred_check_branch
      %49 = sbr.rel (0) target = $region17
    $region16: #{classifier_forward.1} parent=1 // pred_region
      %s51 = ssub.s32 2048, 2048
      %52 = vsyncadd [#allocation9], %s51
      %s53 = sshll.u32 [#allocation8], 4
      %s54 = int_to_ptr.vmem [resolvable:$true] %s53
      %59 = dma.hbm_to_vmem [thread:$0]  %s3, 2048, %s54, [#allocation9], 128, 128, 8
    $region17: #{classifier_forward.1} parent=1 // pred_fallthru
      _
    // Predicated region
    $region18: #{classifier_forward.1} parent=1 // pred_check
      _
    $region19: #{classifier_forward.1} parent=1 // pred_check_branch
      %61 = sbr.rel (0) target = $region21
    $region20: #{classifier_forward.1} parent=1 // pred_region
      _
    $region21: #{classifier_forward.1} parent=1 // pred_fallthru
      _
    // Predicated region
    $region22: #{classifier_forward.1} parent=1 // pred_check
      _
    $region23: #{classifier_forward.1} parent=1 // pred_check_branch
      %63 = sbr.rel (0) target = $region25
    $region24: #{classifier_forward.1} parent=1 // pred_region
      %64 = dma.done [#allocation3], 128
    $region25: #{classifier_forward.1} parent=1 // pred_fallthru
      _
    // Predicated region
    $region26: #{classifier_forward.1} parent=1 // pred_check
      _
    $region27: #{classifier_forward.1} parent=1 // pred_check_branch
      %66 = sbr.rel (0) target = $region29
    $region28: #{classifier_forward.1} parent=1 // pred_region
      %67 = dma.done [#allocation6], 512
    $region29: #{classifier_forward.1} parent=1 // pred_fallthru
      _
    // Predicated region
    $region30: #{classifier_forward.1} parent=1 // pred_check
      _
    $region31: #{classifier_forward.1} parent=1 // pred_check_branch
      %69 = sbr.rel (0) target = $region33
    $region32: #{classifier_forward.1} parent=1 // pred_region
      %70 = dma.done [#allocation6], 2048
    $region33: #{classifier_forward.1} parent=1 // pred_fallthru
      _
    // Predicated region
    $region34: #{classifier_forward.1} parent=1 // pred_check
      _
    $region35: #{classifier_forward.1} parent=1 // pred_check_branch
      %72 = sbr.rel (0) target = $region37
    $region36: #{classifier_forward.1} parent=1 // pred_region
      %73 = dma.done [#allocation9], 2048
    $region37: #{classifier_forward.1} parent=1 // pred_fallthru
      _
    %v74 = vld [vmem:[#allocation2] sm:$0xff]
    %v75 = vld [vmem:[#allocation5] sm:$0xff]
    %v76 = vld [vmem:[#allocation5 + $0x8] sm:$0xff]
    %v77 = vld [vmem:[#allocation5 + $0x10] sm:$0xff]
    %v78 = vld [vmem:[#allocation5 + $0x18] sm:$0xff]
    %v79 = vld [vmem:[%s4] sm:$0x1]
    %v80 = vlaneseq
    %v81 = vshrl.u32 %v80, 7
    %v82 = vsub.s32 0, %v81
    %v83 = vrot.slane %v79, %v82
    %vm84 = vcmask 261120
    %v86 = vsel %vm84, %v74, 0
    %88 = vmatprep.subr.mxu0 0.0
    %89 = vmatpush1.msra.mxu0 %v75
    %90 = vmatprep.subr.mxu0 0.0
    %91 = vmatpush1.msra.mxu0 %v76
    %92 = vmatprep.subr.mxu0 0.0
    %93 = vmatpush1.msra.mxu0 %v77
    %94 = vmatprep.subr.mxu0 0.0
    %95 = vmatpush1.msra.mxu0 %v78
    %96 = vmatprep.subr.mxu0 0.0
    %97 = vmatpush1.msra.mxu0 0.0
    %98 = vmatprep.subr.mxu0 0.0
    %99 = vmatpush1.msra.mxu0 0.0
    %100 = vmatprep.subr.mxu0 0.0
    %101 = vmatpush1.msra.mxu0 0.0
    %102 = vmatprep.subr.mxu0 0.0
    %103 = vmatpush1.msra.mxu0 0.0
    %104 = vmatprep.subr.mxu0 0.0
    %105 = vmatpush1.msra.mxu0 0.0
    %106 = vmatprep.subr.mxu0 0.0
    %107 = vmatpush1.msra.mxu0 0.0
    %108 = vmatprep.subr.mxu0 0.0
    %109 = vmatpush1.msra.mxu0 0.0
    %110 = vmatprep.subr.mxu0 0.0
    %111 = vmatpush1.msra.mxu0 0.0
    %112 = vmatprep.subr.mxu0 0.0
    %113 = vmatpush1.msra.mxu0 0.0
    %114 = vmatprep.subr.mxu0 0.0
    %115 = vmatpush1.msra.mxu0 0.0
    %116 = vmatprep.subr.mxu0 0.0
    %117 = vmatpush1.msra.mxu0 0.0
    %118 = vmatprep.subr.mxu0 0.0
    %119 = vmatpush1.msra.mxu0 0.0
    %120 = vmatprep.subr.mxu0 0.0
    %121 = vmatpush1.msra.mxu0 0.0
    %122 = vmatprep.subr.mxu0 0.0
    %123 = vmatpush1.msra.mxu0 0.0
    %124 = vmatprep.subr.mxu0 0.0
    %125 = vmatpush1.msra.mxu0 0.0
    %126 = vmatprep.subr.mxu0 0.0
    %127 = vmatpush1.msra.mxu0 0.0
    %128 = vmatprep.subr.mxu0 0.0
    %129 = vmatpush1.msra.mxu0 0.0
    %130 = vmatprep.subr.mxu0 0.0
    %131 = vmatpush1.msra.mxu0 0.0
    %132 = vmatprep.subr.mxu0 0.0
    %133 = vmatpush1.msra.mxu0 0.0
    %134 = vmatprep.subr.mxu0 0.0
    %135 = vmatpush1.msra.mxu0 0.0
    %136 = vmatprep.subr.mxu0 0.0
    %137 = vmatpush1.msra.mxu0 0.0
    %138 = vmatprep.subr.mxu0 0.0
    %139 = vmatpush1.msra.mxu0 0.0
    %140 = vmatprep.subr.mxu0 0.0
    %141 = vmatpush1.msra.mxu0 0.0
    %142 = vmatprep.subr.mxu0 0.0
    %143 = vmatpush1.msra.mxu0 0.0
    %144 = vmatprep.subr.mxu0 0.0
    %145 = vmatpush1.msra.mxu0 0.0
    %146 = vmatprep.subr.mxu0 0.0
    %147 = vmatpush1.msra.mxu0 0.0
    %148 = vmatprep.subr.mxu0 0.0
    %149 = vmatpush1.msra.mxu0 0.0
    %150 = vmatprep.subr.mxu0 0.0
    %151 = vmatpush1.msra.mxu0 0.0
    %152 = vmatprep.mubr.f32.mxu0 0.0
    %153 = vmatmul.mubr.f32.gmra.mrb[0].mxu0 %v86
    %v154 = vpop.f32.mrb[0].mxu0
    %v155 = vadd.f32 %v83, %v154
    %v156 = vpop.f32.mrb[0].mxu0
    %157 = vdwg.mxu0
    %v158 = vmax.f32 %v155, 0.0
    %v159 = vld [vmem:[#allocation7] sm:$0xff]
    %v160 = vld [vmem:[#allocation7 + $0x8] sm:$0xff]
    %v161 = vld [vmem:[#allocation7 + $0x10] sm:$0xff]
    %v162 = vld [vmem:[#allocation7 + $0x18] sm:$0xff]
    %v163 = vld [vmem:[#allocation7 + $0x20] sm:$0xff]
    %v164 = vld [vmem:[#allocation7 + $0x28] sm:$0xff]
    %v165 = vld [vmem:[#allocation7 + $0x30] sm:$0xff]
    %v166 = vld [vmem:[#allocation7 + $0x38] sm:$0xff]
    %v167 = vld [vmem:[#allocation7 + $0x40] sm:$0xff]
    %v168 = vld [vmem:[#allocation7 + $0x48] sm:$0xff]
    %v169 = vld [vmem:[#allocation7 + $0x50] sm:$0xff]
    %v170 = vld [vmem:[#allocation7 + $0x58] sm:$0xff]
    %v171 = vld [vmem:[#allocation7 + $0x60] sm:$0xff]
    %v172 = vld [vmem:[#allocation7 + $0x68] sm:$0xff]
    %v173 = vld [vmem:[#allocation7 + $0x70] sm:$0xff]
    %v174 = vld [vmem:[#allocation7 + $0x78] sm:$0xff]
    %v175 = vld [vmem:[%s4 + $0x1] sm:$0x1]
    %v176 = vlaneseq
    %v177 = vshrl.u32 %v176, 7
    %v178 = vsub.s32 0, %v177
    %v179 = vrot.slane %v175, %v178
    %180 = vmatprep.subr.mxu0 0.0
    %181 = vmatpush1.msra.mxu0 %v159
    %182 = vmatprep.subr.mxu0 0.0
    %183 = vmatpush1.msra.mxu0 %v160
    %184 = vmatprep.subr.mxu0 0.0
    %185 = vmatpush1.msra.mxu0 %v161
    %186 = vmatprep.subr.mxu0 0.0
    %187 = vmatpush1.msra.mxu0 %v162
    %188 = vmatprep.subr.mxu0 0.0
    %189 = vmatpush1.msra.mxu0 %v163
    %190 = vmatprep.subr.mxu0 0.0
    %191 = vmatpush1.msra.mxu0 %v164
    %192 = vmatprep.subr.mxu0 0.0
    %193 = vmatpush1.msra.mxu0 %v165
    %194 = vmatprep.subr.mxu0 0.0
    %195 = vmatpush1.msra.mxu0 %v166
    %196 = vmatprep.subr.mxu0 0.0
    %197 = vmatpush1.msra.mxu0 %v167
    %198 = vmatprep.subr.mxu0 0.0
    %199 = vmatpush1.msra.mxu0 %v168
    %200 = vmatprep.subr.mxu0 0.0
    %201 = vmatpush1.msra.mxu0 %v169
    %202 = vmatprep.subr.mxu0 0.0
    %203 = vmatpush1.msra.mxu0 %v170
    %204 = vmatprep.subr.mxu0 0.0
    %205 = vmatpush1.msra.mxu0 %v171
    %206 = vmatprep.subr.mxu0 0.0
    %207 = vmatpush1.msra.mxu0 %v172
    %208 = vmatprep.subr.mxu0 0.0
    %209 = vmatpush1.msra.mxu0 %v173
    %210 = vmatprep.subr.mxu0 0.0
    %211 = vmatpush1.msra.mxu0 %v174
    %212 = vmatprep.subr.mxu0 0.0
    %213 = vmatpush1.msra.mxu0 0.0
    %214 = vmatprep.subr.mxu0 0.0
    %215 = vmatpush1.msra.mxu0 0.0
    %216 = vmatprep.subr.mxu0 0.0
    %217 = vmatpush1.msra.mxu0 0.0
    %218 = vmatprep.subr.mxu0 0.0
    %219 = vmatpush1.msra.mxu0 0.0
    %220 = vmatprep.subr.mxu0 0.0
    %221 = vmatpush1.msra.mxu0 0.0
    %222 = vmatprep.subr.mxu0 0.0
    %223 = vmatpush1.msra.mxu0 0.0
    %224 = vmatprep.subr.mxu0 0.0
    %225 = vmatpush1.msra.mxu0 0.0
    %226 = vmatprep.subr.mxu0 0.0
    %227 = vmatpush1.msra.mxu0 0.0
    %228 = vmatprep.subr.mxu0 0.0
    %229 = vmatpush1.msra.mxu0 0.0
    %230 = vmatprep.subr.mxu0 0.0
    %231 = vmatpush1.msra.mxu0 0.0
    %232 = vmatprep.subr.mxu0 0.0
    %233 = vmatpush1.msra.mxu0 0.0
    %234 = vmatprep.subr.mxu0 0.0
    %235 = vmatpush1.msra.mxu0 0.0
    %236 = vmatprep.subr.mxu0 0.0
    %237 = vmatpush1.msra.mxu0 0.0
    %238 = vmatprep.subr.mxu0 0.0
    %239 = vmatpush1.msra.mxu0 0.0
    %240 = vmatprep.subr.mxu0 0.0
    %241 = vmatpush1.msra.mxu0 0.0
    %242 = vmatprep.subr.mxu0 0.0
    %243 = vmatpush1.msra.mxu0 0.0
    %244 = vmatprep.mubr.f32.mxu0 0.0
    %245 = vmatmul.mubr.f32.gmra.mrb[0].mxu0 %v158
    %v246 = vpop.f32.mrb[0].mxu0
    %v247 = vadd.f32 %v179, %v246
    %v248 = vpop.f32.mrb[0].mxu0
    %249 = vdwg.mxu0
    %v250 = vmax.f32 %v247, 0.0
    %v251 = vld [vmem:[#allocation8] sm:$0xff]
    %v252 = vld [vmem:[#allocation8 + $0x8] sm:$0xff]
    %v253 = vld [vmem:[#allocation8 + $0x10] sm:$0xff]
    %v254 = vld [vmem:[#allocation8 + $0x18] sm:$0xff]
    %v255 = vld [vmem:[#allocation8 + $0x20] sm:$0xff]
    %v256 = vld [vmem:[#allocation8 + $0x28] sm:$0xff]
    %v257 = vld [vmem:[#allocation8 + $0x30] sm:$0xff]
    %v258 = vld [vmem:[#allocation8 + $0x38] sm:$0xff]
    %v259 = vld [vmem:[#allocation8 + $0x40] sm:$0xff]
    %v260 = vld [vmem:[#allocation8 + $0x48] sm:$0xff]
    %v261 = vld [vmem:[#allocation8 + $0x50] sm:$0xff]
    %v262 = vld [vmem:[#allocation8 + $0x58] sm:$0xff]
    %v263 = vld [vmem:[#allocation8 + $0x60] sm:$0xff]
    %v264 = vld [vmem:[#allocation8 + $0x68] sm:$0xff]
    %v265 = vld [vmem:[#allocation8 + $0x70] sm:$0xff]
    %v266 = vld [vmem:[#allocation8 + $0x78] sm:$0xff]
    %v267 = vld [vmem:[%s4 + $0x2] sm:$0x1]
    %v268 = vlaneseq
    %v269 = vshrl.u32 %v268, 7
    %v270 = vsub.s32 0, %v269
    %v271 = vrot.slane %v267, %v270
    %272 = vmatprep.subr.mxu0 0.0
    %273 = vmatpush1.msra.mxu0 %v251
    %274 = vmatprep.subr.mxu0 0.0
    %275 = vmatpush1.msra.mxu0 %v252
    %276 = vmatprep.subr.mxu0 0.0
    %277 = vmatpush1.msra.mxu0 %v253
    %278 = vmatprep.subr.mxu0 0.0
    %279 = vmatpush1.msra.mxu0 %v254
    %280 = vmatprep.subr.mxu0 0.0
    %281 = vmatpush1.msra.mxu0 %v255
    %282 = vmatprep.subr.mxu0 0.0
    %283 = vmatpush1.msra.mxu0 %v256
    %284 = vmatprep.subr.mxu0 0.0
    %285 = vmatpush1.msra.mxu0 %v257
    %286 = vmatprep.subr.mxu0 0.0
    %287 = vmatpush1.msra.mxu0 %v258
    %288 = vmatprep.subr.mxu0 0.0
    %289 = vmatpush1.msra.mxu0 %v259
    %290 = vmatprep.subr.mxu0 0.0
    %291 = vmatpush1.msra.mxu0 %v260
    %292 = vmatprep.subr.mxu0 0.0
    %293 = vmatpush1.msra.mxu0 %v261
    %294 = vmatprep.subr.mxu0 0.0
    %295 = vmatpush1.msra.mxu0 %v262
    %296 = vmatprep.subr.mxu0 0.0
    %297 = vmatpush1.msra.mxu0 %v263
    %298 = vmatprep.subr.mxu0 0.0
    %299 = vmatpush1.msra.mxu0 %v264
    %300 = vmatprep.subr.mxu0 0.0
    %301 = vmatpush1.msra.mxu0 %v265
    %302 = vmatprep.subr.mxu0 0.0
    %303 = vmatpush1.msra.mxu0 %v266
    %304 = vmatprep.subr.mxu0 0.0
    %305 = vmatpush1.msra.mxu0 0.0
    %306 = vmatprep.subr.mxu0 0.0
    %307 = vmatpush1.msra.mxu0 0.0
    %308 = vmatprep.subr.mxu0 0.0
    %309 = vmatpush1.msra.mxu0 0.0
    %310 = vmatprep.subr.mxu0 0.0
    %311 = vmatpush1.msra.mxu0 0.0
    %312 = vmatprep.subr.mxu0 0.0
    %313 = vmatpush1.msra.mxu0 0.0
    %314 = vmatprep.subr.mxu0 0.0
    %315 = vmatpush1.msra.mxu0 0.0
    %316 = vmatprep.subr.mxu0 0.0
    %317 = vmatpush1.msra.mxu0 0.0
    %318 = vmatprep.subr.mxu0 0.0
    %319 = vmatpush1.msra.mxu0 0.0
    %320 = vmatprep.subr.mxu0 0.0
    %321 = vmatpush1.msra.mxu0 0.0
    %322 = vmatprep.subr.mxu0 0.0
    %323 = vmatpush1.msra.mxu0 0.0
    %324 = vmatprep.subr.mxu0 0.0
    %325 = vmatpush1.msra.mxu0 0.0
    %326 = vmatprep.subr.mxu0 0.0
    %327 = vmatpush1.msra.mxu0 0.0
    %328 = vmatprep.subr.mxu0 0.0
    %329 = vmatpush1.msra.mxu0 0.0
    %330 = vmatprep.subr.mxu0 0.0
    %331 = vmatpush1.msra.mxu0 0.0
    %332 = vmatprep.subr.mxu0 0.0
    %333 = vmatpush1.msra.mxu0 0.0
    %334 = vmatprep.subr.mxu0 0.0
    %335 = vmatpush1.msra.mxu0 0.0
    %336 = vmatprep.mubr.f32.mxu0 0.0
    %337 = vmatmul.mubr.f32.gmra.mrb[0].mxu0 %v250
    %v338 = vpop.f32.mrb[0].mxu0
    %v339 = vadd.f32 %v271, %v338
    %v340 = vpop.f32.mrb[0].mxu0
    %341 = vdwg.mxu0
    %342 = vst [vmem:[#allocation10] sm:$0xff] %v339
    // Predicated region
    $region38: #{classifier_forward.1} parent=1 // pred_check
      _
    $region39: #{classifier_forward.1} parent=1 // pred_check_branch
      %344 = sbr.rel (0) target = $region41
    $region40: #{classifier_forward.1} parent=1 // pred_region
      %s346 = ssub.s32 128, 128
      %347 = vsyncadd [#allocation4], %s346
      %s349 = sshll.u32 [#allocation10], 4
      %s350 = int_to_ptr.vmem [resolvable:$true] %s349
      %352 = dma.vmem_to_hbm [thread:$0]  %s350, 128, %s5, [#allocation4]
    $region41: #{classifier_forward.1} parent=1 // pred_fallthru
      _
    // Predicated region
    $region42: #{classifier_forward.1} parent=1 // pred_check
      _
    $region43: #{classifier_forward.1} parent=1 // pred_check_branch
      %354 = sbr.rel (0) target = $region45
    $region44: #{classifier_forward.1} parent=1 // pred_region
      %355 = dma.done [#allocation4], 128
    $region45: #{classifier_forward.1} parent=1 // pred_fallthru
      _
    %356 = vsyncpa [#allocation3], 1
    %357 = vsyncpa [#allocation6], 1
    %358 = vsyncpa [#allocation9], 1
    %359 = vsyncpa [#allocation4], 1

</llo_original>
